<compile_context>
chip_gen: v6e
topology: v6e:2x2x1
jax: 0.10.0
libtpu: 0.0.40
codegen_flags: <defaults>
</compile_context>

<pallas_src>
import jax
import jax.numpy as jnp
import numpy as np
from jax.experimental import pallas as pl
from jax.experimental.pallas import tpu as pltpu

# Fixed MLP-tail geometry from the module: linear3..linear6 are 200->100->50->10->n_out,
# plus linear2 (H->200) at the bottom of the slab.  Row starts kept 8-aligned (sublane tiles).
_W3_OFF, _W3_IN, _W3_OUT = 0, 200, 100
_W4_OFF, _W4_IN, _W4_OUT = 200, 100, 50
_W5_OFF, _W5_IN, _W5_OUT = 304, 50, 10
_W6_OFF, _W6_IN = 360, 10
_W2_OFF, _W2_OUT = 376, 200
_WTAIL_LANES = 256


def attn_decoder_kernel(
    hprev_ref, henc_ref,          # activations: (B, H), (B*T, E)
    wkc_ref, wh_ref, wv_ref,      # packed attention / GRU weights
    wtail_ref, bias_ref,          # packed MLP weights + all biases
    out_ref,                      # (B, H + n_out) = [h_new | x]
):
    f32 = jnp.float32
    B, H = hprev_ref.shape
    BT, E = henc_ref.shape
    T = BT // B
    n_out = out_ref.shape[1] - H

    hprev = hprev_ref[...]                                    # (B, H)

    def mm(x, w):
        return jnp.dot(x, w, preferred_element_type=f32)

    # ---- packed biases (one DMA); each row = one bias group, zero-padded on lanes ----
    bk4 = bias_ref[0:1, 0:4 * H]          # [bk | 0 | 0 | 0]   (ctx half zero: bc added later)
    bh = bias_ref[1:2, 0:4 * H]           # [bq | b_hr | b_hz | b_hn]
    bc = bias_ref[2:3, 0:3 * H]           # [b_ir | b_iz | b_in]
    bv = bias_ref[3:4, 0:1]               # w_v bias (scalar)
    b2 = bias_ref[4:5, 0:_W2_OUT]
    b3 = bias_ref[5:6, 0:_W3_OUT]
    b4 = bias_ref[6:7, 0:_W4_OUT]
    b5 = bias_ref[7:8, 0:_W5_OUT]
    b6 = bias_ref[8:9, 0:n_out]

    # ---- front end: two *independent* matmuls (overlap on the MXU) ----
    # kc = [ henc@W_k + b_k | henc@W_ir | henc@W_iz | henc@W_in ]      (B*T, 4H)
    kc = mm(henc_ref[...], wkc_ref[...]) + bk4
    # gh = [ hprev@W_q + b_q | W_hr h + b_hr | W_hz h + b_hz | W_hn h + b_hn ]   (B, 4H)
    gh = mm(hprev, wh_ref[...]) + bh

    kc3 = kc.reshape(B, T, 4 * H)         # tile-aligned split of the sublane dim (T % 8 == 0)
    key = kc3[:, :, 0:H]                  # (B, T, H)
    kctx = kc3[:, :, H:4 * H]             # (B, T, 3H)  == henc @ [W_ir|W_iz|W_in]
    query = gh[:, 0:H]

    # ---- additive attention (NO softmax: matches the reference module) ----
    s = jnp.tanh(query[:, None, :] + key)                                       # (B, T, H)
    attn = jnp.sum(s * wv_ref[...][None, :, :], axis=-1, keepdims=True) + bv    # (B, T, 1)

    # ---- GRUCell (PyTorch semantics, gate order r, z, n).  The input-side matmul is
    #      hoisted: gi = (attn^T henc) @ W_i* + b_i*  ==  sum_t attn * kctx + b_i* ----
    gi = jnp.sum(attn * kctx, axis=1) + bc                    # (B, 3H)
    r = jax.nn.sigmoid(gi[:, 0:H] + gh[:, H:2 * H])
    z = jax.nn.sigmoid(gi[:, H:2 * H] + gh[:, 2 * H:3 * H])
    n = jnp.tanh(gi[:, 2 * H:3 * H] + r * gh[:, 3 * H:4 * H])
    h_new = (1.0 - z) * n + z * hprev                         # (B, H)

    # ---- MLP head (linear1 is dead in the reference forward -> removed;
    #      dropout is identity in eval mode) ----
    relu = lambda v: jnp.maximum(v, 0.0)
    w2 = wtail_ref[_W2_OFF:_W2_OFF + H, 0:_W2_OUT]
    w3 = wtail_ref[_W3_OFF:_W3_OFF + _W3_IN, 0:_W3_OUT]
    w4 = wtail_ref[_W4_OFF:_W4_OFF + _W4_IN, 0:_W4_OUT]
    w5 = wtail_ref[_W5_OFF:_W5_OFF + _W5_IN, 0:_W5_OUT]
    w6 = wtail_ref[_W6_OFF:_W6_OFF + _W6_IN, 0:n_out]
    x = relu(mm(h_new, w2) + b2)
    x = relu(mm(x, w3) + b3)
    x = relu(mm(x, w4) + b4)
    x = relu(mm(x, w5) + b5)
    x = mm(x, w6) + b6                                        # (B, n_out)

    # Two direct masked stores into the single lane-packed output (no concat / lane-shift).
    out_ref[:, 0:H] = h_new
    out_ref[:, H:H + n_out] = x


# -------------------- parameter packing (one-time, outside the kernel) --------------------
def pack_params(p):
    H = p["wq"].shape[0]
    n_out = p["w6"].shape[1]
    f32 = jnp.float32

    # [W_k | W_ir | W_iz | W_in]  -> one lane-dense (E, 4H) slab, one front-end matmul.
    wkc = jnp.concatenate([p["wk"], p["wih"][0], p["wih"][1], p["wih"][2]], axis=1)
    # [W_q | W_hr | W_hz | W_hn]  -> one (H, 4H) slab.
    wh = jnp.concatenate([p["wq"], p["whh"][0], p["whh"][1], p["whh"][2]], axis=1)

    bias_w = int(np.ceil(max(4 * H, 200) / 128) * 128)

    def row(v):
        v = jnp.asarray(v, f32).reshape(1, -1)
        return jnp.pad(v, ((0, 0), (0, bias_w - v.shape[1])))

    bias = jnp.concatenate([
        row(p["bk"]),                                                   # key bias (ctx half = 0)
        row(jnp.concatenate([p["bq"], p["bhh"][0], p["bhh"][1], p["bhh"][2]], axis=1)),
        row(jnp.concatenate([p["bih"][0], p["bih"][1], p["bih"][2]], axis=1)),
        row(p["bv"].reshape(1, 1)),
        row(p["b2"]), row(p["b3"]), row(p["b4"]), row(p["b5"]), row(p["b6"]),
    ], axis=0)                                                          # (9, bias_w)

    wtail_rows = _W2_OFF + ((H + 7) // 8) * 8
    wtail = jnp.zeros((wtail_rows, _WTAIL_LANES), f32)
    wtail = wtail.at[_W3_OFF:_W3_OFF + _W3_IN, 0:_W3_OUT].set(p["w3"])
    wtail = wtail.at[_W4_OFF:_W4_OFF + _W4_IN, 0:_W4_OUT].set(p["w4"])
    wtail = wtail.at[_W5_OFF:_W5_OFF + _W5_IN, 0:_W5_OUT].set(p["w5"])
    wtail = wtail.at[_W6_OFF:_W6_OFF + _W6_IN, 0:n_out].set(p["w6"])
    wtail = wtail.at[_W2_OFF:_W2_OFF + H, 0:_W2_OUT].set(p["w2"])

    return {"wkc": wkc, "wh": wh, "wv": p["wv"],
            "wtail": wtail, "bias": bias, "n_out": n_out}


def attn_decoder_forward(hidden_prev, hidden_enc, packed):
    B, H = hidden_prev.shape
    T, E = hidden_enc.shape[1], hidden_enc.shape[2]
    n_out = packed["n_out"]
    henc2 = hidden_enc.reshape(B * T, E)       # wrapper-side reshape = free layout plumbing
    args = (hidden_prev, henc2, packed["wkc"], packed["wh"], packed["wv"],
            packed["wtail"], packed["bias"])
    vmem = lambda: pl.BlockSpec(memory_space=pltpu.MemorySpace.VMEM)
    fused = pl.pallas_call(
        attn_decoder_kernel,
        out_shape=jax.ShapeDtypeStruct((B, H + n_out), jnp.float32),
        in_specs=[vmem() for _ in args],
        out_specs=vmem(),
    )(*args)
    # PyTorch return order: (x, h)
    return fused[:, H:], fused[:, :H]
    # TODO(synk): for autoregressive decode, move the time loop inside the kernel
    # (grid over steps, h carried in VMEM scratch) so weights stay VMEM-resident.


# -------------------- deterministic parameter init (unpacked, PyTorch-like) --------------------
def _init_linear(key, fan_in, fan_out):
    kw, kb = jax.random.split(key)
    bound = 1.0 / np.sqrt(fan_in)
    w = jax.random.uniform(kw, (fan_in, fan_out), jnp.float32, -bound, bound)
    b = jax.random.uniform(kb, (1, fan_out), jnp.float32, -bound, bound)
    return w, b


def make_params(key, enc_hidden, hidden, n_out):
    keys = jax.random.split(key, 16)
    p = {}
    p["wq"], p["bq"] = _init_linear(keys[0], hidden, hidden)        # query_proj
    p["wk"], p["bk"] = _init_linear(keys[1], enc_hidden, hidden)    # key_proj
    wv, bv = _init_linear(keys[2], hidden, 1)                       # w_v: Linear(H, 1)
    p["wv"] = wv.T                                                  # (1, H)
    p["bv"] = bv.reshape(1, 1, 1)
    # GRUCell, gate order (r, z, n)
    gb = 1.0 / np.sqrt(hidden)
    p["wih"] = jax.random.uniform(keys[3], (3, enc_hidden, hidden), jnp.float32, -gb, gb)
    p["whh"] = jax.random.uniform(keys[4], (3, hidden, hidden), jnp.float32, -gb, gb)
    p["bih"] = jax.random.uniform(keys[5], (3, 1, hidden), jnp.float32, -gb, gb)
    p["bhh"] = jax.random.uniform(keys[6], (3, 1, hidden), jnp.float32, -gb, gb)
    # MLP head (linear1 is dead in the reference forward; not materialized)
    p["w2"], p["b2"] = _init_linear(keys[8], hidden, 200)
    p["w3"], p["b3"] = _init_linear(keys[9], 200, 100)
    p["w4"], p["b4"] = _init_linear(keys[10], 100, 50)
    p["w5"], p["b5"] = _init_linear(keys[11], 50, 10)
    p["w6"], p["b6"] = _init_linear(keys[12], 10, n_out)
    return p


# -------------------- pure-JAX reference for verification --------------------
def reference(hprev, henc, p):
    q = hprev @ p["wq"] + p["bq"]
    k = jnp.einsum("bte,eh->bth", henc, p["wk"]) + p["bk"]
    s = jnp.tanh(q[:, None, :] + k)
    attn = jnp.einsum("bth,h->bt", s, p["wv"][0]) + p["bv"][0, 0, 0]      # (B, T)
    context = jnp.einsum("bt,bte->be", attn, henc)                        # (B, E)
    gi = [context @ p["wih"][g] + p["bih"][g] for g in range(3)]
    gh = [hprev @ p["whh"][g] + p["bhh"][g] for g in range(3)]
    r = jax.nn.sigmoid(gi[0] + gh[0])
    z = jax.nn.sigmoid(gi[1] + gh[1])
    n = jnp.tanh(gi[2] + r * gh[2])
    h = (1.0 - z) * n + z * hprev
    relu = jax.nn.relu
    x = relu(h @ p["w2"] + p["b2"])
    x = relu(x @ p["w3"] + p["b3"])
    x = relu(x @ p["w4"] + p["b4"])
    x = relu(x @ p["w5"] + p["b5"])
    x = x @ p["w6"] + p["b6"]
    return x, h


if __name__ == "__main__":
    B, T = 2, 8
    enc_hidden, hidden, n_out = 32, 32, 4

    key = jax.random.PRNGKey(0)
    k_param, k_hp, k_he = jax.random.split(key, 3)
    params = make_params(k_param, enc_hidden, hidden, n_out)
    packed = pack_params(params)
    hidden_prev = jax.random.normal(k_hp, (B, hidden), jnp.float32)
    hidden_enc = jax.random.normal(k_he, (B, T, enc_hidden), jnp.float32)

    out, h_new = attn_decoder_forward(hidden_prev, hidden_enc, packed)
    jax.block_until_ready((out, h_new))

    ref_out, ref_h = reference(hidden_prev, hidden_enc, params)
    np.testing.assert_allclose(np.asarray(out), np.asarray(ref_out), rtol=2e-4, atol=2e-4)
    np.testing.assert_allclose(np.asarray(h_new), np.asarray(ref_h), rtol=2e-4, atol=2e-4)

    print("KERNEL_OK")
</pallas_src>

<mosaic_0001>
module attributes {stable_mosaic.version = 11 : i64} {
  func.func @attn_decoder_kernel(%arg0: memref<2x32xf32, #tpu.memory_space<vmem>>, %arg1: memref<16x32xf32, #tpu.memory_space<vmem>>, %arg2: memref<32x128xf32, #tpu.memory_space<vmem>>, %arg3: memref<32x128xf32, #tpu.memory_space<vmem>>, %arg4: memref<1x32xf32, #tpu.memory_space<vmem>>, %arg5: memref<408x256xf32, #tpu.memory_space<vmem>>, %arg6: memref<9x256xf32, #tpu.memory_space<vmem>>, %arg7: memref<2x36xf32, #tpu.memory_space<vmem>>) attributes {dimension_semantics = [], scalar_prefetch = 0 : i64, scratch_operands = 0 : i64, tpu.core_type = #tpu.core_type<tc>} {
    %c0 = arith.constant 0 : index
    %c0_0 = arith.constant 0 : index
    %0 = vector.load %arg0[%c0, %c0_0] : memref<2x32xf32, #tpu.memory_space<vmem>>, vector<2x32xf32>
    %c0_1 = arith.constant 0 : index
    %c0_2 = arith.constant 0 : index
    %1 = vector.load %arg6[%c0_1, %c0_2] : memref<9x256xf32, #tpu.memory_space<vmem>>, vector<1x128xf32>
    %c1 = arith.constant 1 : index
    %c0_3 = arith.constant 0 : index
    %2 = vector.load %arg6[%c1, %c0_3] : memref<9x256xf32, #tpu.memory_space<vmem>>, vector<1x128xf32>
    %c2 = arith.constant 2 : index
    %c0_4 = arith.constant 0 : index
    %3 = vector.load %arg6[%c2, %c0_4] : memref<9x256xf32, #tpu.memory_space<vmem>>, vector<1x96xf32>
    %c3 = arith.constant 3 : index
    %c0_5 = arith.constant 0 : index
    %4 = vector.load %arg6[%c3, %c0_5] : memref<9x256xf32, #tpu.memory_space<vmem>>, vector<1x1xf32>
    %c4 = arith.constant 4 : index
    %c0_6 = arith.constant 0 : index
    %5 = vector.load %arg6[%c4, %c0_6] : memref<9x256xf32, #tpu.memory_space<vmem>>, vector<1x200xf32>
    %c5 = arith.constant 5 : index
    %c0_7 = arith.constant 0 : index
    %6 = vector.load %arg6[%c5, %c0_7] : memref<9x256xf32, #tpu.memory_space<vmem>>, vector<1x100xf32>
    %c6 = arith.constant 6 : index
    %c0_8 = arith.constant 0 : index
    %7 = vector.load %arg6[%c6, %c0_8] : memref<9x256xf32, #tpu.memory_space<vmem>>, vector<1x50xf32>
    %c7 = arith.constant 7 : index
    %c0_9 = arith.constant 0 : index
    %8 = vector.load %arg6[%c7, %c0_9] : memref<9x256xf32, #tpu.memory_space<vmem>>, vector<1x10xf32>
    %c8 = arith.constant 8 : index
    %c0_10 = arith.constant 0 : index
    %9 = vector.load %arg6[%c8, %c0_10] : memref<9x256xf32, #tpu.memory_space<vmem>>, vector<1x4xf32>
    %c0_11 = arith.constant 0 : index
    %c0_12 = arith.constant 0 : index
    %10 = vector.load %arg1[%c0_11, %c0_12] : memref<16x32xf32, #tpu.memory_space<vmem>>, vector<16x32xf32>
    %c0_13 = arith.constant 0 : index
    %c0_14 = arith.constant 0 : index
    %11 = vector.load %arg2[%c0_13, %c0_14] : memref<32x128xf32, #tpu.memory_space<vmem>>, vector<32x128xf32>
    %cst = arith.constant dense<0.000000e+00> : vector<16x128xf32>
    %12 = tpu.matmul %10, %11, %cst {dimension_numbers = #tpu.dot_dimension_numbers<[1], [0], [0], [1], [0, 0, 1, 1], [], []>} : vector<16x32xf32>, vector<32x128xf32>, vector<16x128xf32> -> vector<16x128xf32>
    %13 = vector.broadcast %1 : vector<1x128xf32> to vector<16x128xf32>
    %14 = arith.addf %12, %13 : vector<16x128xf32>
    %c0_15 = arith.constant 0 : index
    %c0_16 = arith.constant 0 : index
    %15 = vector.load %arg3[%c0_15, %c0_16] : memref<32x128xf32, #tpu.memory_space<vmem>>, vector<32x128xf32>
    %cst_17 = arith.constant dense<0.000000e+00> : vector<2x128xf32>
    %16 = tpu.matmul %0, %15, %cst_17 {dimension_numbers = #tpu.dot_dimension_numbers<[1], [0], [0], [1], [0, 0, 1, 1], [], []>} : vector<2x32xf32>, vector<32x128xf32>, vector<2x128xf32> -> vector<2x128xf32>
    %17 = vector.broadcast %2 : vector<1x128xf32> to vector<2x128xf32>
    %18 = arith.addf %16, %17 : vector<2x128xf32>
    %19 = vector.shape_cast %14 : vector<16x128xf32> to vector<2x8x128xf32>
    %20 = vector.extract_strided_slice %19 {offsets = [0, 0, 0], sizes = [2, 8, 32], strides = [1, 1, 1]} : vector<2x8x128xf32> to vector<2x8x32xf32>
    %21 = vector.extract_strided_slice %19 {offsets = [0, 0, 32], sizes = [2, 8, 96], strides = [1, 1, 1]} : vector<2x8x128xf32> to vector<2x8x96xf32>
    %22 = vector.extract_strided_slice %18 {offsets = [0, 0], sizes = [2, 32], strides = [1, 1]} : vector<2x128xf32> to vector<2x32xf32>
    %23 = vector.shape_cast %22 : vector<2x32xf32> to vector<2x1x32xf32>
    %24 = vector.broadcast %23 : vector<2x1x32xf32> to vector<2x8x32xf32>
    %25 = arith.addf %24, %20 : vector<2x8x32xf32>
    %26 = math.tanh %25 : vector<2x8x32xf32>
    %c0_18 = arith.constant 0 : index
    %c0_19 = arith.constant 0 : index
    %27 = vector.load %arg4[%c0_18, %c0_19] : memref<1x32xf32, #tpu.memory_space<vmem>>, vector<1x32xf32>
    %28 = vector.shape_cast %27 : vector<1x32xf32> to vector<1x1x32xf32>
    %29 = vector.broadcast %28 : vector<1x1x32xf32> to vector<2x8x32xf32>
    %30 = arith.mulf %26, %29 : vector<2x8x32xf32>
    %cst_20 = arith.constant dense<0.000000e+00> : vector<2x8xf32>
    %31 = vector.multi_reduction <add>, %30, %cst_20 [2] : vector<2x8x32xf32> to vector<2x8xf32>
    %32 = vector.shape_cast %31 : vector<2x8xf32> to vector<2x8x1xf32>
    %33 = vector.shape_cast %4 : vector<1x1xf32> to vector<1x1x1xf32>
    %34 = vector.broadcast %33 : vector<1x1x1xf32> to vector<2x8x1xf32>
    %35 = arith.addf %32, %34 : vector<2x8x1xf32>
    %36 = vector.broadcast %35 : vector<2x8x1xf32> to vector<2x8x96xf32>
    %37 = arith.mulf %36, %21 : vector<2x8x96xf32>
    %cst_21 = arith.constant dense<0.000000e+00> : vector<2x96xf32>
    %38 = vector.multi_reduction <add>, %37, %cst_21 [1] : vector<2x8x96xf32> to vector<2x96xf32>
    %39 = vector.broadcast %3 : vector<1x96xf32> to vector<2x96xf32>
    %40 = arith.addf %38, %39 : vector<2x96xf32>
    %41 = vector.extract_strided_slice %40 {offsets = [0, 0], sizes = [2, 32], strides = [1, 1]} : vector<2x96xf32> to vector<2x32xf32>
    %42 = vector.extract_strided_slice %18 {offsets = [0, 32], sizes = [2, 32], strides = [1, 1]} : vector<2x128xf32> to vector<2x32xf32>
    %43 = arith.addf %41, %42 : vector<2x32xf32>
    %44 = arith.negf %43 : vector<2x32xf32>
    %45 = math.exp %44 : vector<2x32xf32>
    %cst_22 = arith.constant 1.000000e+00 : f32
    %46 = vector.broadcast %cst_22 : f32 to vector<2x32xf32>
    %47 = arith.addf %46, %45 : vector<2x32xf32>
    %48 = arith.divf %46, %47 : vector<2x32xf32>
    %49 = vector.extract_strided_slice %40 {offsets = [0, 32], sizes = [2, 32], strides = [1, 1]} : vector<2x96xf32> to vector<2x32xf32>
    %50 = vector.extract_strided_slice %18 {offsets = [0, 64], sizes = [2, 32], strides = [1, 1]} : vector<2x128xf32> to vector<2x32xf32>
    %51 = arith.addf %49, %50 : vector<2x32xf32>
    %52 = arith.negf %51 : vector<2x32xf32>
    %53 = math.exp %52 : vector<2x32xf32>
    %cst_23 = arith.constant 1.000000e+00 : f32
    %54 = vector.broadcast %cst_23 : f32 to vector<2x32xf32>
    %55 = arith.addf %54, %53 : vector<2x32xf32>
    %56 = arith.divf %54, %55 : vector<2x32xf32>
    %57 = vector.extract_strided_slice %40 {offsets = [0, 64], sizes = [2, 32], strides = [1, 1]} : vector<2x96xf32> to vector<2x32xf32>
    %58 = vector.extract_strided_slice %18 {offsets = [0, 96], sizes = [2, 32], strides = [1, 1]} : vector<2x128xf32> to vector<2x32xf32>
    %59 = arith.mulf %48, %58 : vector<2x32xf32>
    %60 = arith.addf %57, %59 : vector<2x32xf32>
    %61 = math.tanh %60 : vector<2x32xf32>
    %cst_24 = arith.constant 1.000000e+00 : f32
    %62 = vector.broadcast %cst_24 : f32 to vector<2x32xf32>
    %63 = arith.subf %62, %56 : vector<2x32xf32>
    %64 = arith.mulf %63, %61 : vector<2x32xf32>
    %65 = arith.mulf %56, %0 : vector<2x32xf32>
    %66 = arith.addf %64, %65 : vector<2x32xf32>
    %c376 = arith.constant 376 : index
    %c0_25 = arith.constant 0 : index
    %67 = vector.load %arg5[%c376, %c0_25] : memref<408x256xf32, #tpu.memory_space<vmem>>, vector<32x200xf32>
    %c0_26 = arith.constant 0 : index
    %c0_27 = arith.constant 0 : index
    %68 = vector.load %arg5[%c0_26, %c0_27] : memref<408x256xf32, #tpu.memory_space<vmem>>, vector<200x100xf32>
    %c200 = arith.constant 200 : index
    %c0_28 = arith.constant 0 : index
    %69 = vector.load %arg5[%c200, %c0_28] : memref<408x256xf32, #tpu.memory_space<vmem>>, vector<100x50xf32>
    %c304 = arith.constant 304 : index
    %c0_29 = arith.constant 0 : index
    %70 = vector.load %arg5[%c304, %c0_29] : memref<408x256xf32, #tpu.memory_space<vmem>>, vector<50x10xf32>
    %c360 = arith.constant 360 : index
    %c0_30 = arith.constant 0 : index
    %71 = vector.load %arg5[%c360, %c0_30] : memref<408x256xf32, #tpu.memory_space<vmem>>, vector<10x4xf32>
    %cst_31 = arith.constant dense<0.000000e+00> : vector<2x200xf32>
    %72 = tpu.matmul %66, %67, %cst_31 {dimension_numbers = #tpu.dot_dimension_numbers<[1], [0], [0], [1], [0, 0, 1, 1], [], []>} : vector<2x32xf32>, vector<32x200xf32>, vector<2x200xf32> -> vector<2x200xf32>
    %73 = vector.broadcast %5 : vector<1x200xf32> to vector<2x200xf32>
    %74 = arith.addf %72, %73 : vector<2x200xf32>
    %cst_32 = arith.constant 0.000000e+00 : f32
    %75 = vector.broadcast %cst_32 : f32 to vector<2x200xf32>
    %76 = arith.maximumf %74, %75 : vector<2x200xf32>
    %cst_33 = arith.constant dense<0.000000e+00> : vector<2x100xf32>
    %77 = tpu.matmul %76, %68, %cst_33 {dimension_numbers = #tpu.dot_dimension_numbers<[1], [0], [0], [1], [0, 0, 1, 1], [], []>} : vector<2x200xf32>, vector<200x100xf32>, vector<2x100xf32> -> vector<2x100xf32>
    %78 = vector.broadcast %6 : vector<1x100xf32> to vector<2x100xf32>
    %79 = arith.addf %77, %78 : vector<2x100xf32>
    %cst_34 = arith.constant 0.000000e+00 : f32
    %80 = vector.broadcast %cst_34 : f32 to vector<2x100xf32>
    %81 = arith.maximumf %79, %80 : vector<2x100xf32>
    %cst_35 = arith.constant dense<0.000000e+00> : vector<2x50xf32>
    %82 = tpu.matmul %81, %69, %cst_35 {dimension_numbers = #tpu.dot_dimension_numbers<[1], [0], [0], [1], [0, 0, 1, 1], [], []>} : vector<2x100xf32>, vector<100x50xf32>, vector<2x50xf32> -> vector<2x50xf32>
    %83 = vector.broadcast %7 : vector<1x50xf32> to vector<2x50xf32>
    %84 = arith.addf %82, %83 : vector<2x50xf32>
    %cst_36 = arith.constant 0.000000e+00 : f32
    %85 = vector.broadcast %cst_36 : f32 to vector<2x50xf32>
    %86 = arith.maximumf %84, %85 : vector<2x50xf32>
    %cst_37 = arith.constant dense<0.000000e+00> : vector<2x10xf32>
    %87 = tpu.matmul %86, %70, %cst_37 {dimension_numbers = #tpu.dot_dimension_numbers<[1], [0], [0], [1], [0, 0, 1, 1], [], []>} : vector<2x50xf32>, vector<50x10xf32>, vector<2x10xf32> -> vector<2x10xf32>
    %88 = vector.broadcast %8 : vector<1x10xf32> to vector<2x10xf32>
    %89 = arith.addf %87, %88 : vector<2x10xf32>
    %cst_38 = arith.constant 0.000000e+00 : f32
    %90 = vector.broadcast %cst_38 : f32 to vector<2x10xf32>
    %91 = arith.maximumf %89, %90 : vector<2x10xf32>
    %cst_39 = arith.constant dense<0.000000e+00> : vector<2x4xf32>
    %92 = tpu.matmul %91, %71, %cst_39 {dimension_numbers = #tpu.dot_dimension_numbers<[1], [0], [0], [1], [0, 0, 1, 1], [], []>} : vector<2x10xf32>, vector<10x4xf32>, vector<2x4xf32> -> vector<2x4xf32>
    %93 = vector.broadcast %9 : vector<1x4xf32> to vector<2x4xf32>
    %94 = arith.addf %92, %93 : vector<2x4xf32>
    %c0_40 = arith.constant 0 : index
    %c0_41 = arith.constant 0 : index
    %95 = vector.load %arg7[%c0_40, %c0_41] : memref<2x36xf32, #tpu.memory_space<vmem>>, vector<2x32xf32>
    tpu.vector_store %arg7[%c0_40, %c0_41], %66 {strides = array<i32>} : memref<2x36xf32, #tpu.memory_space<vmem>>, vector<2x32xf32>,
    %c0_42 = arith.constant 0 : index
    %c32 = arith.constant 32 : index
    %96 = vector.load %arg7[%c0_42, %c32] : memref<2x36xf32, #tpu.memory_space<vmem>>, vector<2x4xf32>
    tpu.vector_store %arg7[%c0_42, %c32], %94 {strides = array<i32>} : memref<2x36xf32, #tpu.memory_space<vmem>>, vector<2x4xf32>,
    return
  }
}

</mosaic_0001>

<llo_original>
// kernel: tpu_custom_call.1
$region0: #{tpu_custom_call.1}
  #allocation0 [shape = 'u32[]', space=smem, size = 0x4, offset = 0x4, fixed_abs, tag = 'smem constant byte address 0x4 - core index']
  #allocation1 [shape = 'u32[144,128]{1,0:T(1,128)}', space=vmem, size = 0x12000, scoped, tag = 'internal scratch']
  %s0 = inlined_call_operand.hbm [shape: f32[2,32], index: 0, kind: input, shape index: {}]
  %s1 = inlined_call_operand.hbm [shape: f32[16,32], index: 1, kind: input, shape index: {}]
  %s2 = inlined_call_operand.hbm [shape: f32[32,128], index: 2, kind: input, shape index: {}]
  %s3 = inlined_call_operand.hbm [shape: f32[32,128], index: 3, kind: input, shape index: {}]
  %s4 = inlined_call_operand.vmem [shape: f32[1,32], index: 4, kind: input, shape index: {}]
  %s5 = inlined_call_operand.hbm [shape: f32[408,256], index: 5, kind: input, shape index: {}]
  %s6 = inlined_call_operand.hbm [shape: f32[9,256], index: 6, kind: input, shape index: {}]
  %s7 = inlined_call_operand.hbm [shape: f32[2,36], index: 7, kind: output, shape index: {}]
  %s8 = sld [smem:[#allocation0]]
  $region62: #{tpu_custom_call.1} parent=0
    _
  %s10 = ssub.s32 1, %s8
  %s11 = scalar_select 0, %s10, %s8
  $region1: #{tpu_custom_call.1} parent=0
    #allocation2 [shape = 'u8[1024]{0}', space=vmem, size = 0x400, scoped, tag = 'input window, operand 0, single buffered']
    #allocation3 [shape = 's32[1]{0}', space=sflag, size = 0x4, scoped, tag = 'scoped memory for tpu_custom_call.1']
    #allocation4 [shape = 's32[1]{0}', space=sflag, size = 0x4, scoped, tag = 'scoped memory for tpu_custom_call.1']
    #allocation5 [shape = 'u8[8192]{0}', space=vmem, size = 0x2000, scoped, tag = 'input window, operand 1, single buffered']
    #allocation6 [shape = 's32[1]{0}', space=sflag, size = 0x4, scoped, tag = 'scoped memory for tpu_custom_call.1']
    #allocation7 [shape = 'u8[16384]{0}', space=vmem, size = 0x4000, scoped, tag = 'input window, operand 2, single buffered']
    #allocation8 [shape = 'u8[16384]{0}', space=vmem, size = 0x4000, scoped, tag = 'input window, operand 3, single buffered']
    #allocation9 [shape = 's32[1]{0}', space=sflag, size = 0x4, scoped, tag = 'scoped memory for tpu_custom_call.1']
    #allocation10 [shape = 'u8[417792]{0}', space=vmem, size = 0x66000, scoped, tag = 'input window, operand 5, single buffered']
    #allocation11 [shape = 'u8[16384]{0}', space=vmem, size = 0x4000, scoped, tag = 'input window, operand 6, single buffered']
    #allocation12 [shape = 's32[1]{0}', space=sflag, size = 0x4, scoped, tag = 'scoped memory for tpu_custom_call.1']
    #allocation13 [shape = 'u8[1024]{0}', space=vmem, size = 0x400, scoped, tag = 'output window, operand 0, single buffered']
    %12 = vsyncpa [#allocation3], 0
    %13 = vsyncpa [#allocation6], 0
    %14 = vsyncpa [#allocation9], 0
    %15 = vsyncpa [#allocation12], 0
    %16 = vsyncpa [#allocation4], 0
    // Predicated region
    $region2: #{tpu_custom_call.1} parent=1 // pred_check
      _
    $region3: #{tpu_custom_call.1} parent=1 // pred_check_branch
      %18 = sbr.rel (0) target = $region5
    $region4: #{tpu_custom_call.1} parent=1 // pred_region
      %s20 = ssub.s32 32, 32
      %21 = vsyncadd [#allocation3], %s20
      %s23 = sshll.u32 [#allocation2], 4
      %s24 = int_to_ptr.vmem [resolvable:$true] %s23
      %26 = dma.hbm_to_vmem [thread:$0]  %s0, 32, %s24, [#allocation3]
    $region5: #{tpu_custom_call.1} parent=1 // pred_fallthru
      _
    // Predicated region
    $region6: #{tpu_custom_call.1} parent=1 // pred_check
      _
    $region7: #{tpu_custom_call.1} parent=1 // pred_check_branch
      %28 = sbr.rel (0) target = $region9
    $region8: #{tpu_custom_call.1} parent=1 // pred_region
      %s30 = ssub.s32 256, 256
      %31 = vsyncadd [#allocation6], %s30
      %s32 = sshll.u32 [#allocation5], 4
      %s33 = int_to_ptr.vmem [resolvable:$true] %s32
      %38 = dma.hbm_to_vmem [thread:$0]  %s1, 256, %s33, [#allocation6], 128, 128, 8
    $region9: #{tpu_custom_call.1} parent=1 // pred_fallthru
      _
    // Predicated region
    $region10: #{tpu_custom_call.1} parent=1 // pred_check
      _
    $region11: #{tpu_custom_call.1} parent=1 // pred_check_branch
      %40 = sbr.rel (0) target = $region13
    $region12: #{tpu_custom_call.1} parent=1 // pred_region
      %s42 = ssub.s32 512, 512
      %43 = vsyncadd [#allocation6], %s42
      %s44 = sshll.u32 [#allocation7], 4
      %s45 = int_to_ptr.vmem [resolvable:$true] %s44
      %50 = dma.hbm_to_vmem [thread:$0]  %s2, 512, %s45, [#allocation6], 128, 128, 8
    $region13: #{tpu_custom_call.1} parent=1 // pred_fallthru
      _
    // Predicated region
    $region14: #{tpu_custom_call.1} parent=1 // pred_check
      _
    $region15: #{tpu_custom_call.1} parent=1 // pred_check_branch
      %52 = sbr.rel (0) target = $region17
    $region16: #{tpu_custom_call.1} parent=1 // pred_region
      %s54 = ssub.s32 512, 512
      %55 = vsyncadd [#allocation9], %s54
      %s56 = sshll.u32 [#allocation8], 4
      %s57 = int_to_ptr.vmem [resolvable:$true] %s56
      %62 = dma.hbm_to_vmem [thread:$0]  %s3, 512, %s57, [#allocation9], 128, 128, 8
    $region17: #{tpu_custom_call.1} parent=1 // pred_fallthru
      _
    // Predicated region
    $region18: #{tpu_custom_call.1} parent=1 // pred_check
      _
    $region19: #{tpu_custom_call.1} parent=1 // pred_check_branch
      %64 = sbr.rel (0) target = $region21
    $region20: #{tpu_custom_call.1} parent=1 // pred_region
      _
    $region21: #{tpu_custom_call.1} parent=1 // pred_fallthru
      _
    // Predicated region
    $region22: #{tpu_custom_call.1} parent=1 // pred_check
      _
    $region23: #{tpu_custom_call.1} parent=1 // pred_check_branch
      %66 = sbr.rel (0) target = $region25
    $region24: #{tpu_custom_call.1} parent=1 // pred_region
      %s68 = ssub.s32 13056, 13056
      %69 = vsyncadd [#allocation9], %s68
      %s70 = sshll.u32 [#allocation10], 4
      %s71 = int_to_ptr.vmem [resolvable:$true] %s70
      %76 = dma.hbm_to_vmem [thread:$0]  %s5, 13056, %s71, [#allocation9], 256, 256, 16
    $region25: #{tpu_custom_call.1} parent=1 // pred_fallthru
      _
    // Predicated region
    $region26: #{tpu_custom_call.1} parent=1 // pred_check
      _
    $region27: #{tpu_custom_call.1} parent=1 // pred_check_branch
      %78 = sbr.rel (0) target = $region29
    $region28: #{tpu_custom_call.1} parent=1 // pred_region
      %s80 = ssub.s32 512, 512
      %81 = vsyncadd [#allocation12], %s80
      %s82 = sshll.u32 [#allocation11], 4
      %s83 = int_to_ptr.vmem [resolvable:$true] %s82
      %88 = dma.hbm_to_vmem [thread:$0]  %s6, 512, %s83, [#allocation12], 256, 256, 16
    $region29: #{tpu_custom_call.1} parent=1 // pred_fallthru
      _
    // Predicated region
    $region30: #{tpu_custom_call.1} parent=1 // pred_check
      _
    $region31: #{tpu_custom_call.1} parent=1 // pred_check_branch
      %90 = sbr.rel (0) target = $region33
    $region32: #{tpu_custom_call.1} parent=1 // pred_region
      %91 = dma.done [#allocation3], 32
    $region33: #{tpu_custom_call.1} parent=1 // pred_fallthru
      _
    // Predicated region
    $region34: #{tpu_custom_call.1} parent=1 // pred_check
      _
    $region35: #{tpu_custom_call.1} parent=1 // pred_check_branch
      %93 = sbr.rel (0) target = $region37
    $region36: #{tpu_custom_call.1} parent=1 // pred_region
      %94 = dma.done [#allocation6], 256
    $region37: #{tpu_custom_call.1} parent=1 // pred_fallthru
      _
    // Predicated region
    $region38: #{tpu_custom_call.1} parent=1 // pred_check
      _
    $region39: #{tpu_custom_call.1} parent=1 // pred_check_branch
      %96 = sbr.rel (0) target = $region41
    $region40: #{tpu_custom_call.1} parent=1 // pred_region
      %97 = dma.done [#allocation6], 512
    $region41: #{tpu_custom_call.1} parent=1 // pred_fallthru
      _
    // Predicated region
    $region42: #{tpu_custom_call.1} parent=1 // pred_check
      _
    $region43: #{tpu_custom_call.1} parent=1 // pred_check_branch
      %99 = sbr.rel (0) target = $region45
    $region44: #{tpu_custom_call.1} parent=1 // pred_region
      %100 = dma.done [#allocation9], 512
    $region45: #{tpu_custom_call.1} parent=1 // pred_fallthru
      _
    // Predicated region
    $region46: #{tpu_custom_call.1} parent=1 // pred_check
      _
    $region47: #{tpu_custom_call.1} parent=1 // pred_check_branch
      %102 = sbr.rel (0) target = $region49
    $region48: #{tpu_custom_call.1} parent=1 // pred_region
      %103 = dma.done [#allocation9], 13056
    $region49: #{tpu_custom_call.1} parent=1 // pred_fallthru
      _
    // Predicated region
    $region50: #{tpu_custom_call.1} parent=1 // pred_check
      _
    $region51: #{tpu_custom_call.1} parent=1 // pred_check_branch
      %105 = sbr.rel (0) target = $region53
    $region52: #{tpu_custom_call.1} parent=1 // pred_region
      %106 = dma.done [#allocation12], 512
    $region53: #{tpu_custom_call.1} parent=1 // pred_fallthru
      _
    %v107 = vld [vmem:[#allocation2] sm:$0x3]
    %v108 = vld [vmem:[#allocation11] ss:$0 sm:$0xff]
    %v109 = vld [vmem:[#allocation11 + $0x1] ss:$0 sm:$0xff]
    %v110 = vld [vmem:[#allocation11 + $0x2] ss:$0 sm:$0xff]
    %v111 = vld [vmem:[#allocation11 + $0x3] ss:$0 sm:$0xff]
    %s112 = scalar_lea.vmem [#allocation11], 4
    %v113 = vld [vmem:[%s112] ss:$8 sm:$0x3]
    %v114 = vld [vmem:[#allocation11 + $0x5] ss:$0 sm:$0xff]
    %v115 = vld [vmem:[#allocation11 + $0x6] ss:$0 sm:$0xff]
    %v116 = vld [vmem:[#allocation11 + $0x7] ss:$0 sm:$0xff]
    %v117 = vld [vmem:[#allocation11 + $0x10] ss:$0 sm:$0xff]
    %v118 = vld [vmem:[#allocation5] sm:$0xff]
    %v119 = vld [vmem:[#allocation5 + $0x8] sm:$0xff]
    %v120 = vld [vmem:[#allocation7] sm:$0xff]
    %v121 = vld [vmem:[#allocation7 + $0x8] sm:$0xff]
    %v122 = vld [vmem:[#allocation7 + $0x10] sm:$0xff]
    %v123 = vld [vmem:[#allocation7 + $0x18] sm:$0xff]
    %vm124 = vcmask 261120
    %v126 = vsel %vm124, %v118, 0
    %v129 = vsel %vm124, %v119, 0
    %131 = vmatprep.subr.mxu0 0.0
    %132 = vmatpush1.msra.mxu0 0.0
    %133 = vmatprep.subr.mxu0 0.0
    %134 = vmatpush1.msra.mxu0 0.0
    %135 = vmatprep.subr.mxu0 0.0
    %136 = vmatpush1.msra.mxu0 0.0
    %137 = vmatprep.subr.mxu0 0.0
    %138 = vmatpush1.msra.mxu0 0.0
    %139 = vmatprep.subr.mxu0 0.0
    %140 = vmatpush1.msra.mxu0 0.0
    %141 = vmatprep.subr.mxu0 0.0
    %142 = vmatpush1.msra.mxu0 0.0
    %143 = vmatprep.subr.mxu0 0.0
    %144 = vmatpush1.msra.mxu0 0.0
    %145 = vmatprep.subr.mxu0 0.0
    %146 = vmatpush1.msra.mxu0 0.0
    %147 = vmatprep.subr.mxu0 0.0
    %148 = vmatpush1.msra.mxu0 0.0
    %149 = vmatprep.subr.mxu0 0.0
    %150 = vmatpush1.msra.mxu0 0.0
    %151 = vmatprep.subr.mxu0 0.0
    %152 = vmatpush1.msra.mxu0 0.0
    %153 = vmatprep.subr.mxu0 0.0
    %154 = vmatpush1.msra.mxu0 0.0
    %155 = vmatprep.subr.mxu0 0.0
    %156 = vmatpush1.msra.mxu0 %v123
    %157 = vmatprep.subr.mxu0 0.0
    %158 = vmatpush1.msra.mxu0 %v122
    %159 = vmatprep.subr.mxu0 0.0
    %160 = vmatpush1.msra.mxu0 %v121
    %161 = vmatprep.subr.mxu0 0.0
    %162 = vmatpush1.msra.mxu0 %v120
    %163 = vmatprep.subr.mxu0 0.0
    %164 = vmatpush2.msra.mxu0 0.0
    %165 = vmatprep.subr.mxu0 0.0
    %166 = vmatpush2.msra.mxu0 0.0
    %167 = vmatprep.subr.mxu0 0.0
    %168 = vmatpush2.msra.mxu0 0.0
    %169 = vmatprep.subr.mxu0 0.0
    %170 = vmatpush2.msra.mxu0 0.0
    %171 = vmatprep.subr.mxu0 0.0
    %172 = vmatpush2.msra.mxu0 0.0
    %173 = vmatprep.subr.mxu0 0.0
    %174 = vmatpush2.msra.mxu0 0.0
    %175 = vmatprep.subr.mxu0 0.0
    %176 = vmatpush2.msra.mxu0 0.0
    %177 = vmatprep.subr.mxu0 0.0
    %178 = vmatpush2.msra.mxu0 0.0
    %179 = vmatprep.subr.mxu0 0.0
    %180 = vmatpush2.msra.mxu0 0.0
    %181 = vmatprep.subr.mxu0 0.0
    %182 = vmatpush2.msra.mxu0 0.0
    %183 = vmatprep.subr.mxu0 0.0
    %184 = vmatpush2.msra.mxu0 0.0
    %185 = vmatprep.subr.mxu0 0.0
    %186 = vmatpush2.msra.mxu0 0.0
    %187 = vmatprep.subr.mxu0 0.0
    %188 = vmatpush2.msra.mxu0 0.0
    %189 = vmatprep.subr.mxu0 0.0
    %190 = vmatpush2.msra.mxu0 0.0
    %191 = vmatprep.subr.mxu0 0.0
    %192 = vmatpush2.msra.mxu0 0.0
    %193 = vmatprep.subr.mxu0 0.0
    %194 = vmatpush2.msra.mxu0 0.0
    %195 = vmatprep.mubr.f32.mxu0 0.0
    %196 = vmatmul.mubr.f32.gmra.mxu0 %v126
    %v197 = vpop.f32.mrf.mxu0
    %v198 = vadd.f32 %v108, %v197
    %v199 = vpop.f32.mrf.mxu0
    %200 = vmatprep.mubr.f32.mxu0 0.0
    %201 = vmatmul.mubr.f32.gmra.mxu0 %v129
    %v202 = vpop.f32.mrf.mxu0
    %v203 = vadd.f32 %v108, %v202
    %v204 = vpop.f32.mrf.mxu0
    %205 = vdwg.mxu0
    %v206 = vld [vmem:[#allocation8] sm:$0xff]
    %v207 = vld [vmem:[#allocation8 + $0x8] sm:$0xff]
    %v208 = vld [vmem:[#allocation8 + $0x10] sm:$0xff]
    %v209 = vld [vmem:[#allocation8 + $0x18] sm:$0xff]
    %v211 = vsel %vm124, %v107, 0
    %213 = vmatprep.subr.mxu0 0.0
    %214 = vmatpush1.msra.mxu0 0.0
    %215 = vmatprep.subr.mxu0 0.0
    %216 = vmatpush1.msra.mxu0 0.0
    %217 = vmatprep.subr.mxu0 0.0
    %218 = vmatpush1.msra.mxu0 0.0
    %219 = vmatprep.subr.mxu0 0.0
    %220 = vmatpush1.msra.mxu0 0.0
    %221 = vmatprep.subr.mxu0 0.0
    %222 = vmatpush1.msra.mxu0 0.0
    %223 = vmatprep.subr.mxu0 0.0
    %224 = vmatpush1.msra.mxu0 0.0
    %225 = vmatprep.subr.mxu0 0.0
    %226 = vmatpush1.msra.mxu0 0.0
    %227 = vmatprep.subr.mxu0 0.0
    %228 = vmatpush1.msra.mxu0 0.0
    %229 = vmatprep.subr.mxu0 0.0
    %230 = vmatpush1.msra.mxu0 0.0
    %231 = vmatprep.subr.mxu0 0.0
    %232 = vmatpush1.msra.mxu0 0.0
    %233 = vmatprep.subr.mxu0 0.0
    %234 = vmatpush1.msra.mxu0 0.0
    %235 = vmatprep.subr.mxu0 0.0
    %236 = vmatpush1.msra.mxu0 0.0
    %237 = vmatprep.subr.mxu0 0.0
    %238 = vmatpush1.msra.mxu0 %v209
    %239 = vmatprep.subr.mxu0 0.0
    %240 = vmatpush1.msra.mxu0 %v208
    %241 = vmatprep.subr.mxu0 0.0
    %242 = vmatpush1.msra.mxu0 %v207
    %243 = vmatprep.subr.mxu0 0.0
    %244 = vmatpush1.msra.mxu0 %v206
    %245 = vmatprep.subr.mxu0 0.0
    %246 = vmatpush2.msra.mxu0 0.0
    %247 = vmatprep.subr.mxu0 0.0
    %248 = vmatpush2.msra.mxu0 0.0
    %249 = vmatprep.subr.mxu0 0.0
    %250 = vmatpush2.msra.mxu0 0.0
    %251 = vmatprep.subr.mxu0 0.0
    %252 = vmatpush2.msra.mxu0 0.0
    %253 = vmatprep.subr.mxu0 0.0
    %254 = vmatpush2.msra.mxu0 0.0
    %255 = vmatprep.subr.mxu0 0.0
    %256 = vmatpush2.msra.mxu0 0.0
    %257 = vmatprep.subr.mxu0 0.0
    %258 = vmatpush2.msra.mxu0 0.0
    %259 = vmatprep.subr.mxu0 0.0
    %260 = vmatpush2.msra.mxu0 0.0
    %261 = vmatprep.subr.mxu0 0.0
    %262 = vmatpush2.msra.mxu0 0.0
    %263 = vmatprep.subr.mxu0 0.0
    %264 = vmatpush2.msra.mxu0 0.0
    %265 = vmatprep.subr.mxu0 0.0
    %266 = vmatpush2.msra.mxu0 0.0
    %267 = vmatprep.subr.mxu0 0.0
    %268 = vmatpush2.msra.mxu0 0.0
    %269 = vmatprep.subr.mxu0 0.0
    %270 = vmatpush2.msra.mxu0 0.0
    %271 = vmatprep.subr.mxu0 0.0
    %272 = vmatpush2.msra.mxu0 0.0
    %273 = vmatprep.subr.mxu0 0.0
    %274 = vmatpush2.msra.mxu0 0.0
    %275 = vmatprep.subr.mxu0 0.0
    %276 = vmatpush2.msra.mxu0 0.0
    %277 = vmatprep.mubr.f32.mxu0 0.0
    %278 = vmatmul.mubr.f32.gmra.mxu0 %v211
    %v279 = vpop.f32.mrf.mxu0
    %v280 = vadd.f32 %v109, %v279
    %v281 = vpop.f32.mrf.mxu0
    %282 = vdwg.mxu0
    %v285 = vunpack.c.l.s4 1966171168
    %v286 = vunpack.c.0.s8 %v285
    %v287 = vlaneseq
    %v288 = vshrl.u32 %v287, 7
    %v289 = vsub.s32 %v286, %v288
    %v290 = vrot.slane %v280, %v289
    %v291 = vcombine.high %v290, %v290
    %v293 = vunpack.c.l.s4 1966171168
    %v294 = vunpack.c.0.s8 %v293
    %v295 = vlaneseq
    %v296 = vshrl.u32 %v295, 7
    %v297 = vsub.s32 %v294, %v296
    %v298 = vrot.slane %v290, %v297
    %v300 = vunpack.c.l.s4 1966171168
    %v301 = vunpack.c.0.s8 %v300
    %v302 = vlaneseq
    %v303 = vshrl.u32 %v302, 7
    %v304 = vsub.s32 %v301, %v303
    %v305 = vrot.slane %v291, %v304
    %v306 = vlaneseq
    %v307 = vshrl.u32 %v306, 7
    %v308 = vsub.s32 0, %v307
    %v309 = vrot.slane %v298, %v308
    %v310 = vlaneseq
    %v311 = vshrl.u32 %v310, 7
    %v312 = vsub.s32 0, %v311
    %v313 = vrot.slane %v305, %v312
    %v316 = vadd.f32 %v309, %v198
    %v317 = vadd.f32 %v313, %v203
    %v318 = vtanh.pop %v316
    %v319 = vtanh.pop %v317
    %v320 = vld [vmem:[%s4] sm:$0x1]
    %v322 = vlaneseq
    %v323 = vshrl.u32 %v322, 7
    %v324 = vsub.s32 0, %v323
    %v325 = vrot.slane %v320, %v324
    %v327 = vmul.f32 %v318, %v325
    %v328 = vmul.f32 %v319, %v325
    %v329 = vsel %vm124, %v327, 0.0
    %330 = vadd.xlane.f32.xlu0 %v329
    %v331 = vpop.xlane.xlu0 %330
    %v332 = vsel %vm124, %v328, 0.0
    %333 = vadd.xlane.f32.xlu0 %v332
    %v334 = vpop.xlane.xlu0 %333
    %v335 = vadd.f32 %v331, %v111
    %v336 = vadd.f32 %v334, %v111
    %338 = vset.pattern.permute.xlu0 0
    %339 = vperm.xlu0 %338, %v335
    %v340 = vpop.permute.xlu0 %339
    %343 = vset.pattern.permute.xlu0 0
    %344 = vperm.xlu0 %343, %v336
    %v345 = vpop.permute.xlu0 %344
    %v347 = vmul.f32 %v340, %v198
    %v348 = vmul.f32 %v345, %v203
    %vm349 = vcmask 1047808
    %v350 = vsel %vm349, %v347, 0.0
    %v351 = vrot.slane %v350, 4
    %v352 = vadd.f32 %v350, %v351
    %v353 = vrot.slane %v352, 2
    %v354 = vadd.f32 %v352, %v353
    %v355 = vrot.slane %v354, 1
    %v356 = vadd.f32 %v354, %v355
    %v357 = vsel %vm349, %v348, 0.0
    %v358 = vrot.slane %v357, 4
    %v359 = vadd.f32 %v357, %v358
    %v360 = vrot.slane %v359, 2
    %v361 = vadd.f32 %v359, %v360
    %v362 = vrot.slane %v361, 1
    %v363 = vadd.f32 %v361, %v362
    %365 = vrot.lane.b32.xlu0 %v110, 32
    %v366 = vpop.permute.xlu0 %365
    %v368 = vadd.f32 %v356, %v366
    %v369 = vadd.f32 %v363, %v366
    %v370 = vrot.slane %v280, 1
    %v373 = vadd.f32 %v368, %v280
    %v374 = vadd.f32 %v369, %v370
    %v375 = vxor.u32 %v373, 2147483648
    %v376 = vxor.u32 %v374, 2147483648
    %v377 = vmul.f32 %v375, 1.442695
    %v378 = vpow.pop %v377
    %v379 = vmul.f32 %v376, 1.442695
    %v380 = vpow.pop %v379
    %v381 = vadd.f32 %v378, 1.0
    %v382 = vadd.f32 %v380, 1.0
    %v383 = vrcp.pop %v381
    %v384 = vmul.f32 1.0, %v383
    %v385 = vrcp.pop %v382
    %v386 = vmul.f32 1.0, %v385
    %387 = vrot.lane.b32.xlu0 %v280, 64
    %v388 = vpop.permute.xlu0 %387
    %389 = vrot.lane.b32.xlu0 %v370, 64
    %v390 = vpop.permute.xlu0 %389
    %v393 = vmul.f32 %v384, %v388
    %v394 = vmul.f32 %v386, %v390
    %397 = vrot.lane.b32.xlu0 %v393, 64
    %v398 = vpop.permute.xlu0 %397
    %399 = vrot.lane.b32.xlu0 %v394, 64
    %v400 = vpop.permute.xlu0 %399
    %v403 = vadd.f32 %v368, %v398
    %v404 = vadd.f32 %v369, %v400
    %v405 = vtanh.pop %v403
    %v406 = vtanh.pop %v404
    %v407 = vsub.f32 1.0, %v384
    %v408 = vsub.f32 1.0, %v386
    %411 = vrot.lane.b32.xlu0 %v405, 96
    %v412 = vpop.permute.xlu0 %411
    %413 = vrot.lane.b32.xlu0 %v406, 96
    %v414 = vpop.permute.xlu0 %413
    %v417 = vmul.f32 %v407, %v412
    %v418 = vmul.f32 %v408, %v414
    %v419 = vrot.slane %v107, 1
    %420 = vrot.lane.b32.xlu0 %v107, 64
    %v421 = vpop.permute.xlu0 %420
    %422 = vrot.lane.b32.xlu0 %v419, 64
    %v423 = vpop.permute.xlu0 %422
    %v426 = vmul.f32 %v384, %v421
    %v427 = vmul.f32 %v386, %v423
    %v428 = vadd.f32 %v417, %v426
    %v429 = vadd.f32 %v418, %v427
    %v430 = vld [vmem:[#allocation10 + $0x2f0] sm:$0xff]
    %v431 = vld [vmem:[#allocation10 + $0x2f8] sm:$0xff]
    %v432 = vld [vmem:[#allocation10 + $0x300] sm:$0xff]
    %v433 = vld [vmem:[#allocation10 + $0x308] sm:$0xff]
    %v434 = vld [vmem:[#allocation10 + $0x310] sm:$0xff]
    %v435 = vld [vmem:[#allocation10 + $0x318] sm:$0xff]
    %v436 = vld [vmem:[#allocation10 + $0x320] sm:$0xff]
    %v437 = vld [vmem:[#allocation10 + $0x328] sm:$0xff]
    %v438 = vld [vmem:[#allocation10] sm:$0xff]
    %v439 = vld [vmem:[#allocation10 + $0x10] sm:$0xff]
    %v440 = vld [vmem:[#allocation10 + $0x20] sm:$0xff]
    %v441 = vld [vmem:[#allocation10 + $0x30] sm:$0xff]
    %v442 = vld [vmem:[#allocation10 + $0x40] sm:$0xff]
    %v443 = vld [vmem:[#allocation10 + $0x50] sm:$0xff]
    %v444 = vld [vmem:[#allocation10 + $0x60] sm:$0xff]
    %v445 = vld [vmem:[#allocation10 + $0x70] sm:$0xff]
    %v446 = vld [vmem:[#allocation10 + $0x80] sm:$0xff]
    %v447 = vld [vmem:[#allocation10 + $0x90] sm:$0xff]
    %v448 = vld [vmem:[#allocation10 + $0xa0] sm:$0xff]
    %v449 = vld [vmem:[#allocation10 + $0xb0] sm:$0xff]
    %v450 = vld [vmem:[#allocation10 + $0xc0] sm:$0xff]
    %v451 = vld [vmem:[#allocation10 + $0xd0] sm:$0xff]
    %v452 = vld [vmem:[#allocation10 + $0xe0] sm:$0xff]
    %v453 = vld [vmem:[#allocation10 + $0xf0] sm:$0xff]
    %v454 = vld [vmem:[#allocation10 + $0x100] sm:$0xff]
    %v455 = vld [vmem:[#allocation10 + $0x110] sm:$0xff]
    %v456 = vld [vmem:[#allocation10 + $0x120] sm:$0xff]
    %v457 = vld [vmem:[#allocation10 + $0x130] sm:$0xff]
    %v458 = vld [vmem:[#allocation10 + $0x140] sm:$0xff]
    %v459 = vld [vmem:[#allocation10 + $0x150] sm:$0xff]
    %v460 = vld [vmem:[#allocation10 + $0x160] sm:$0xff]
    %v461 = vld [vmem:[#allocation10 + $0x170] sm:$0xff]
    %v462 = vld [vmem:[#allocation10 + $0x180] sm:$0xff]
    %v463 = vld [vmem:[#allocation10 + $0x190] sm:$0xff]
    %v464 = vld [vmem:[#allocation10 + $0x1a0] sm:$0xff]
    %v465 = vld [vmem:[#allocation10 + $0x1b0] sm:$0xff]
    %v466 = vld [vmem:[#allocation10 + $0x1c0] sm:$0xff]
    %v467 = vld [vmem:[#allocation10 + $0x1d0] sm:$0xff]
    %v468 = vld [vmem:[#allocation10 + $0x1e0] sm:$0xff]
    %v469 = vld [vmem:[#allocation10 + $0x1f0] sm:$0xff]
    %v470 = vld [vmem:[#allocation10 + $0x200] sm:$0xff]
    %v471 = vld [vmem:[#allocation10 + $0x210] sm:$0xff]
    %v472 = vld [vmem:[#allocation10 + $0x220] sm:$0xff]
    %v473 = vld [vmem:[#allocation10 + $0x230] sm:$0xff]
    %v474 = vld [vmem:[#allocation10 + $0x240] sm:$0xff]
    %v475 = vld [vmem:[#allocation10 + $0x250] sm:$0xf]
    %v476 = vld [vmem:[#allocation10 + $0x260] sm:$0xff]
    %v477 = vld [vmem:[#allocation10 + $0x270] sm:$0xff]
    %v478 = vld [vmem:[#allocation10 + $0x280] sm:$0xff]
    %v479 = vld [vmem:[#allocation10 + $0x290] sm:$0xff]
    %v480 = vld [vmem:[#allocation10 + $0x2a0] sm:$0xff]
    %v481 = vld [vmem:[#allocation10 + $0x2b0] sm:$0xff]
    %v482 = vld [vmem:[#allocation10 + $0x2c0] sm:$0x3]
    %v483 = vld [vmem:[#allocation10 + $0x2d0] sm:$0xff]
    %v484 = vld [vmem:[#allocation10 + $0x2e0] sm:$0x3]
    %v486 = vlaneseq
    %v487 = vshrl.u32 %v486, 7
    %v488 = vsub.s32 0, %v487
    %v489 = vrot.slane %v113, %v488
    %v490 = vlaneseq
    %v491 = vshrl.u32 %v490, 7
    %v492 = vsub.s32 1, %v491
    %v493 = vrot.slane %v113, %v492
    %v498 = vrot.slane %v429, 7
    %vm499 = vcmask 1041409
    %v500 = vsel %vm499, %v498, %v428
    %501 = vrot.lane.b32.xlu0 %v500, 64
    %v502 = vpop.permute.xlu0 %501
    %v503 = vsel %vm124, %v502, 0
    %505 = vmatprep.subr.mxu0 0.0
    %506 = vmatpush1.msra.mxu0 0.0
    %507 = vmatprep.subr.mxu0 0.0
    %508 = vmatpush1.msra.mxu0 0.0
    %509 = vmatprep.subr.mxu0 0.0
    %510 = vmatpush1.msra.mxu0 0.0
    %511 = vmatprep.subr.mxu0 0.0
    %512 = vmatpush1.msra.mxu0 0.0
    %513 = vmatprep.subr.mxu0 0.0
    %514 = vmatpush1.msra.mxu0 0.0
    %515 = vmatprep.subr.mxu0 0.0
    %516 = vmatpush1.msra.mxu0 0.0
    %517 = vmatprep.subr.mxu0 0.0
    %518 = vmatpush1.msra.mxu0 0.0
    %519 = vmatprep.subr.mxu0 0.0
    %520 = vmatpush1.msra.mxu0 0.0
    %521 = vmatprep.subr.mxu0 0.0
    %522 = vmatpush1.msra.mxu0 0.0
    %523 = vmatprep.subr.mxu0 0.0
    %524 = vmatpush1.msra.mxu0 0.0
    %525 = vmatprep.subr.mxu0 0.0
    %526 = vmatpush1.msra.mxu0 0.0
    %527 = vmatprep.subr.mxu0 0.0
    %528 = vmatpush1.msra.mxu0 0.0
    %529 = vmatprep.subr.mxu0 %v437
    %530 = vmatpush1.msra.mxu0 %v436
    %531 = vmatprep.subr.mxu0 %v435
    %532 = vmatpush1.msra.mxu0 %v434
    %533 = vmatprep.subr.mxu0 %v433
    %534 = vmatpush1.msra.mxu0 %v432
    %535 = vmatprep.subr.mxu0 %v431
    %536 = vmatpush1.msra.mxu0 %v430
    %537 = vmatprep.subr.mxu0 0.0
    %538 = vmatpush2.msra.mxu0 0.0
    %539 = vmatprep.subr.mxu0 0.0
    %540 = vmatpush2.msra.mxu0 0.0
    %541 = vmatprep.subr.mxu0 0.0
    %542 = vmatpush2.msra.mxu0 0.0
    %543 = vmatprep.subr.mxu0 0.0
    %544 = vmatpush2.msra.mxu0 0.0
    %545 = vmatprep.subr.mxu0 0.0
    %546 = vmatpush2.msra.mxu0 0.0
    %547 = vmatprep.subr.mxu0 0.0
    %548 = vmatpush2.msra.mxu0 0.0
    %549 = vmatprep.subr.mxu0 0.0
    %550 = vmatpush2.msra.mxu0 0.0
    %551 = vmatprep.subr.mxu0 0.0
    %552 = vmatpush2.msra.mxu0 0.0
    %553 = vmatprep.subr.mxu0 0.0
    %554 = vmatpush2.msra.mxu0 0.0
    %555 = vmatprep.subr.mxu0 0.0
    %556 = vmatpush2.msra.mxu0 0.0
    %557 = vmatprep.subr.mxu0 0.0
    %558 = vmatpush2.msra.mxu0 0.0
    %559 = vmatprep.subr.mxu0 0.0
    %560 = vmatpush2.msra.mxu0 0.0
    %561 = vmatprep.subr.mxu0 0.0
    %562 = vmatpush2.msra.mxu0 0.0
    %563 = vmatprep.subr.mxu0 0.0
    %564 = vmatpush2.msra.mxu0 0.0
    %565 = vmatprep.subr.mxu0 0.0
    %566 = vmatpush2.msra.mxu0 0.0
    %567 = vmatprep.subr.mxu0 0.0
    %568 = vmatpush2.msra.mxu0 0.0
    %569 = vmatprep.mubr.f32.mxu0 0.0
    %570 = vmatmul.mubr.f32.gmra.mxu0 %v503
    %v571 = vpop.f32.mrf.mxu0
    %v572 = vadd.f32 %v489, %v571
    %v573 = vpop.f32.mrf.mxu0
    %v574 = vadd.f32 %v493, %v573
    %575 = vdwg.mxu0
    %v576 = vmax.f32 %v572, 0.0
    %v577 = vmax.f32 %v574, 0.0
    %vm578 = vcmask 588800
    %v580 = vsel %vm578, %v577, 0
    %582 = vmatprep.subr.mxu0 0.0
    %583 = vmatpush1.msra.mxu0 %v453
    %584 = vmatprep.subr.mxu0 0.0
    %585 = vmatpush1.msra.mxu0 %v452
    %586 = vmatprep.subr.mxu0 0.0
    %587 = vmatpush1.msra.mxu0 %v451
    %588 = vmatprep.subr.mxu0 0.0
    %589 = vmatpush1.msra.mxu0 %v450
    %590 = vmatprep.subr.mxu0 0.0
    %591 = vmatpush1.msra.mxu0 %v449
    %592 = vmatprep.subr.mxu0 0.0
    %593 = vmatpush1.msra.mxu0 %v448
    %594 = vmatprep.subr.mxu0 0.0
    %595 = vmatpush1.msra.mxu0 %v447
    %596 = vmatprep.subr.mxu0 0.0
    %597 = vmatpush1.msra.mxu0 %v446
    %598 = vmatprep.subr.mxu0 0.0
    %599 = vmatpush1.msra.mxu0 %v445
    %600 = vmatprep.subr.mxu0 0.0
    %601 = vmatpush1.msra.mxu0 %v444
    %602 = vmatprep.subr.mxu0 0.0
    %603 = vmatpush1.msra.mxu0 %v443
    %604 = vmatprep.subr.mxu0 0.0
    %605 = vmatpush1.msra.mxu0 %v442
    %606 = vmatprep.subr.mxu0 0.0
    %607 = vmatpush1.msra.mxu0 %v441
    %608 = vmatprep.subr.mxu0 0.0
    %609 = vmatpush1.msra.mxu0 %v440
    %610 = vmatprep.subr.mxu0 0.0
    %611 = vmatpush1.msra.mxu0 %v439
    %612 = vmatprep.subr.mxu0 0.0
    %613 = vmatpush1.msra.mxu0 %v438
    %614 = vmatprep.subr.mxu0 0.0
    %615 = vmatpush2.msra.mxu0 0.0
    %616 = vmatprep.subr.mxu0 0.0
    %617 = vmatpush2.msra.mxu0 0.0
    %618 = vmatprep.subr.mxu0 0.0
    %619 = vmatpush2.msra.mxu0 0.0
    %620 = vmatprep.subr.mxu0 0.0
    %621 = vmatpush2.msra.mxu0 0.0
    %622 = vmatprep.subr.mxu0 0.0
    %623 = vmatpush2.msra.mxu0 0.0
    %624 = vmatprep.subr.mxu0 0.0
    %625 = vmatpush2.msra.mxu0 0.0
    %626 = vmatprep.subr.mxu0 0.0
    %627 = vmatpush2.msra.mxu0 0.0
    %628 = vmatprep.subr.mxu0 0.0
    %629 = vmatpush2.msra.mxu0 %v462
    %630 = vmatprep.subr.mxu0 0.0
    %631 = vmatpush2.msra.mxu0 %v461
    %632 = vmatprep.subr.mxu0 0.0
    %633 = vmatpush2.msra.mxu0 %v460
    %634 = vmatprep.subr.mxu0 0.0
    %635 = vmatpush2.msra.mxu0 %v459
    %636 = vmatprep.subr.mxu0 0.0
    %637 = vmatpush2.msra.mxu0 %v458
    %638 = vmatprep.subr.mxu0 0.0
    %639 = vmatpush2.msra.mxu0 %v457
    %640 = vmatprep.subr.mxu0 0.0
    %641 = vmatpush2.msra.mxu0 %v456
    %642 = vmatprep.subr.mxu0 0.0
    %643 = vmatpush2.msra.mxu0 %v455
    %644 = vmatprep.subr.mxu0 0.0
    %645 = vmatpush2.msra.mxu0 %v454
    %646 = vmatprep.mubr.f32.mxu0 %v580
    %647 = vmatmul.mubr.f32.gmra.mxu0 %v576
    %v648 = vpop.f32.mrf.mxu0
    %v649 = vadd.f32 %v114, %v648
    %v650 = vpop.f32.mrf.mxu0
    %651 = vdwg.mxu0
    %v652 = vmax.f32 %v649, 0.0
    %vm653 = vcmask 818176
    %v655 = vsel %vm653, %v652, 0
    %vm657 = vcmask 1043456
    %v659 = vsel %vm657, %v475, 0
    %661 = vmatprep.subr.mxu0 0.0
    %662 = vmatpush1.msra.mxu0 0.0
    %663 = vmatprep.subr.mxu0 0.0
    %664 = vmatpush1.msra.mxu0 0.0
    %665 = vmatprep.subr.mxu0 0.0
    %666 = vmatpush1.msra.mxu0 0.0
    %667 = vmatprep.subr.mxu0 0.0
    %668 = vmatpush1.msra.mxu0 %v659
    %669 = vmatprep.subr.mxu0 0.0
    %670 = vmatpush1.msra.mxu0 %v474
    %671 = vmatprep.subr.mxu0 0.0
    %672 = vmatpush1.msra.mxu0 %v473
    %673 = vmatprep.subr.mxu0 0.0
    %674 = vmatpush1.msra.mxu0 %v472
    %675 = vmatprep.subr.mxu0 0.0
    %676 = vmatpush1.msra.mxu0 %v471
    %677 = vmatprep.subr.mxu0 0.0
    %678 = vmatpush1.msra.mxu0 %v470
    %679 = vmatprep.subr.mxu0 0.0
    %680 = vmatpush1.msra.mxu0 %v469
    %681 = vmatprep.subr.mxu0 0.0
    %682 = vmatpush1.msra.mxu0 %v468
    %683 = vmatprep.subr.mxu0 0.0
    %684 = vmatpush1.msra.mxu0 %v467
    %685 = vmatprep.subr.mxu0 0.0
    %686 = vmatpush1.msra.mxu0 %v466
    %687 = vmatprep.subr.mxu0 0.0
    %688 = vmatpush1.msra.mxu0 %v465
    %689 = vmatprep.subr.mxu0 0.0
    %690 = vmatpush1.msra.mxu0 %v464
    %691 = vmatprep.subr.mxu0 0.0
    %692 = vmatpush1.msra.mxu0 %v463
    %693 = vmatprep.subr.mxu0 0.0
    %694 = vmatpush2.msra.mxu0 0.0
    %695 = vmatprep.subr.mxu0 0.0
    %696 = vmatpush2.msra.mxu0 0.0
    %697 = vmatprep.subr.mxu0 0.0
    %698 = vmatpush2.msra.mxu0 0.0
    %699 = vmatprep.subr.mxu0 0.0
    %700 = vmatpush2.msra.mxu0 0.0
    %701 = vmatprep.subr.mxu0 0.0
    %702 = vmatpush2.msra.mxu0 0.0
    %703 = vmatprep.subr.mxu0 0.0
    %704 = vmatpush2.msra.mxu0 0.0
    %705 = vmatprep.subr.mxu0 0.0
    %706 = vmatpush2.msra.mxu0 0.0
    %707 = vmatprep.subr.mxu0 0.0
    %708 = vmatpush2.msra.mxu0 0.0
    %709 = vmatprep.subr.mxu0 0.0
    %710 = vmatpush2.msra.mxu0 0.0
    %711 = vmatprep.subr.mxu0 0.0
    %712 = vmatpush2.msra.mxu0 0.0
    %713 = vmatprep.subr.mxu0 0.0
    %714 = vmatpush2.msra.mxu0 0.0
    %715 = vmatprep.subr.mxu0 0.0
    %716 = vmatpush2.msra.mxu0 0.0
    %717 = vmatprep.subr.mxu0 0.0
    %718 = vmatpush2.msra.mxu0 0.0
    %719 = vmatprep.subr.mxu0 0.0
    %720 = vmatpush2.msra.mxu0 0.0
    %721 = vmatprep.subr.mxu0 0.0
    %722 = vmatpush2.msra.mxu0 0.0
    %723 = vmatprep.subr.mxu0 0.0
    %724 = vmatpush2.msra.mxu0 0.0
    %725 = vmatprep.mubr.f32.mxu0 0.0
    %726 = vmatmul.mubr.f32.gmra.mxu0 %v655
    %v727 = vpop.f32.mrf.mxu0
    %v728 = vadd.f32 %v115, %v727
    %v729 = vpop.f32.mrf.mxu0
    %730 = vdwg.mxu0
    %v731 = vmax.f32 %v728, 0.0
    %vm732 = vcmask 408576
    %v734 = vsel %vm732, %v731, 0
    %vm736 = vcmask 1041408
    %v738 = vsel %vm736, %v482, 0
    %740 = vmatprep.subr.mxu0 0.0
    %741 = vmatpush1.msra.mxu0 0.0
    %742 = vmatprep.subr.mxu0 0.0
    %743 = vmatpush1.msra.mxu0 0.0
    %744 = vmatprep.subr.mxu0 0.0
    %745 = vmatpush1.msra.mxu0 0.0
    %746 = vmatprep.subr.mxu0 0.0
    %747 = vmatpush1.msra.mxu0 0.0
    %748 = vmatprep.subr.mxu0 0.0
    %749 = vmatpush1.msra.mxu0 0.0
    %750 = vmatprep.subr.mxu0 0.0
    %751 = vmatpush1.msra.mxu0 0.0
    %752 = vmatprep.subr.mxu0 0.0
    %753 = vmatpush1.msra.mxu0 0.0
    %754 = vmatprep.subr.mxu0 0.0
    %755 = vmatpush1.msra.mxu0 0.0
    %756 = vmatprep.subr.mxu0 0.0
    %757 = vmatpush1.msra.mxu0 0.0
    %758 = vmatprep.subr.mxu0 0.0
    %759 = vmatpush1.msra.mxu0 %v738
    %760 = vmatprep.subr.mxu0 0.0
    %761 = vmatpush1.msra.mxu0 %v481
    %762 = vmatprep.subr.mxu0 0.0
    %763 = vmatpush1.msra.mxu0 %v480
    %764 = vmatprep.subr.mxu0 0.0
    %765 = vmatpush1.msra.mxu0 %v479
    %766 = vmatprep.subr.mxu0 0.0
    %767 = vmatpush1.msra.mxu0 %v478
    %768 = vmatprep.subr.mxu0 0.0
    %769 = vmatpush1.msra.mxu0 %v477
    %770 = vmatprep.subr.mxu0 0.0
    %771 = vmatpush1.msra.mxu0 %v476
    %772 = vmatprep.subr.mxu0 0.0
    %773 = vmatpush2.msra.mxu0 0.0
    %774 = vmatprep.subr.mxu0 0.0
    %775 = vmatpush2.msra.mxu0 0.0
    %776 = vmatprep.subr.mxu0 0.0
    %777 = vmatpush2.msra.mxu0 0.0
    %778 = vmatprep.subr.mxu0 0.0
    %779 = vmatpush2.msra.mxu0 0.0
    %780 = vmatprep.subr.mxu0 0.0
    %781 = vmatpush2.msra.mxu0 0.0
    %782 = vmatprep.subr.mxu0 0.0
    %783 = vmatpush2.msra.mxu0 0.0
    %784 = vmatprep.subr.mxu0 0.0
    %785 = vmatpush2.msra.mxu0 0.0
    %786 = vmatprep.subr.mxu0 0.0
    %787 = vmatpush2.msra.mxu0 0.0
    %788 = vmatprep.subr.mxu0 0.0
    %789 = vmatpush2.msra.mxu0 0.0
    %790 = vmatprep.subr.mxu0 0.0
    %791 = vmatpush2.msra.mxu0 0.0
    %792 = vmatprep.subr.mxu0 0.0
    %793 = vmatpush2.msra.mxu0 0.0
    %794 = vmatprep.subr.mxu0 0.0
    %795 = vmatpush2.msra.mxu0 0.0
    %796 = vmatprep.subr.mxu0 0.0
    %797 = vmatpush2.msra.mxu0 0.0
    %798 = vmatprep.subr.mxu0 0.0
    %799 = vmatpush2.msra.mxu0 0.0
    %800 = vmatprep.subr.mxu0 0.0
    %801 = vmatpush2.msra.mxu0 0.0
    %802 = vmatprep.subr.mxu0 0.0
    %803 = vmatpush2.msra.mxu0 0.0
    %804 = vmatprep.mubr.f32.mxu0 0.0
    %805 = vmatmul.mubr.f32.gmra.mxu0 %v734
    %v806 = vpop.f32.mrf.mxu0
    %v807 = vadd.f32 %v116, %v806
    %v808 = vpop.f32.mrf.mxu0
    %809 = vdwg.mxu0
    %v810 = vmax.f32 %v807, 0.0
    %vm811 = vcmask 80896
    %v813 = vsel %vm811, %v810, 0
    %v816 = vsel %vm736, %v484, 0
    %818 = vmatprep.subr.mxu0 0.0
    %819 = vmatpush1.msra.mxu0 0.0
    %820 = vmatprep.subr.mxu0 0.0
    %821 = vmatpush1.msra.mxu0 0.0
    %822 = vmatprep.subr.mxu0 0.0
    %823 = vmatpush1.msra.mxu0 0.0
    %824 = vmatprep.subr.mxu0 0.0
    %825 = vmatpush1.msra.mxu0 0.0
    %826 = vmatprep.subr.mxu0 0.0
    %827 = vmatpush1.msra.mxu0 0.0
    %828 = vmatprep.subr.mxu0 0.0
    %829 = vmatpush1.msra.mxu0 0.0
    %830 = vmatprep.subr.mxu0 0.0
    %831 = vmatpush1.msra.mxu0 0.0
    %832 = vmatprep.subr.mxu0 0.0
    %833 = vmatpush1.msra.mxu0 0.0
    %834 = vmatprep.subr.mxu0 0.0
    %835 = vmatpush1.msra.mxu0 0.0
    %836 = vmatprep.subr.mxu0 0.0
    %837 = vmatpush1.msra.mxu0 0.0
    %838 = vmatprep.subr.mxu0 0.0
    %839 = vmatpush1.msra.mxu0 0.0
    %840 = vmatprep.subr.mxu0 0.0
    %841 = vmatpush1.msra.mxu0 0.0
    %842 = vmatprep.subr.mxu0 0.0
    %843 = vmatpush1.msra.mxu0 0.0
    %844 = vmatprep.subr.mxu0 0.0
    %845 = vmatpush1.msra.mxu0 0.0
    %846 = vmatprep.subr.mxu0 0.0
    %847 = vmatpush1.msra.mxu0 %v816
    %848 = vmatprep.subr.mxu0 0.0
    %849 = vmatpush1.msra.mxu0 %v483
    %850 = vmatprep.subr.mxu0 0.0
    %851 = vmatpush2.msra.mxu0 0.0
    %852 = vmatprep.subr.mxu0 0.0
    %853 = vmatpush2.msra.mxu0 0.0
    %854 = vmatprep.subr.mxu0 0.0
    %855 = vmatpush2.msra.mxu0 0.0
    %856 = vmatprep.subr.mxu0 0.0
    %857 = vmatpush2.msra.mxu0 0.0
    %858 = vmatprep.subr.mxu0 0.0
    %859 = vmatpush2.msra.mxu0 0.0
    %860 = vmatprep.subr.mxu0 0.0
    %861 = vmatpush2.msra.mxu0 0.0
    %862 = vmatprep.subr.mxu0 0.0
    %863 = vmatpush2.msra.mxu0 0.0
    %864 = vmatprep.subr.mxu0 0.0
    %865 = vmatpush2.msra.mxu0 0.0
    %866 = vmatprep.subr.mxu0 0.0
    %867 = vmatpush2.msra.mxu0 0.0
    %868 = vmatprep.subr.mxu0 0.0
    %869 = vmatpush2.msra.mxu0 0.0
    %870 = vmatprep.subr.mxu0 0.0
    %871 = vmatpush2.msra.mxu0 0.0
    %872 = vmatprep.subr.mxu0 0.0
    %873 = vmatpush2.msra.mxu0 0.0
    %874 = vmatprep.subr.mxu0 0.0
    %875 = vmatpush2.msra.mxu0 0.0
    %876 = vmatprep.subr.mxu0 0.0
    %877 = vmatpush2.msra.mxu0 0.0
    %878 = vmatprep.subr.mxu0 0.0
    %879 = vmatpush2.msra.mxu0 0.0
    %880 = vmatprep.subr.mxu0 0.0
    %881 = vmatpush2.msra.mxu0 0.0
    %882 = vmatprep.mubr.f32.mxu0 0.0
    %883 = vmatmul.mubr.f32.gmra.mxu0 %v813
    %v884 = vpop.f32.mrf.mxu0
    %v885 = vadd.f32 %v117, %v884
    %v886 = vpop.f32.mrf.mxu0
    %887 = vdwg.mxu0
    %vm889 = vcmask 254976
    %890 = vst.msk [vmem:[#allocation13] sm:$0x3] %vm889, %v502
    %892 = vrot.lane.b32.xlu0 %v885, 32
    %v893 = vpop.permute.xlu0 %892
    %vm895 = vcmask 288000
    %896 = vst.msk [vmem:[#allocation13] sm:$0x3] %vm895, %v893
    // Predicated region
    $region54: #{tpu_custom_call.1} parent=1 // pred_check
      _
    $region55: #{tpu_custom_call.1} parent=1 // pred_check_branch
      %898 = sbr.rel (0) target = $region57
    $region56: #{tpu_custom_call.1} parent=1 // pred_region
      %s900 = ssub.s32 32, 32
      %901 = vsyncadd [#allocation4], %s900
      %s903 = sshll.u32 [#allocation13], 4
      %s904 = int_to_ptr.vmem [resolvable:$true] %s903
      %906 = dma.vmem_to_hbm [thread:$0]  %s904, 32, %s7, [#allocation4]
    $region57: #{tpu_custom_call.1} parent=1 // pred_fallthru
      _
    // Predicated region
    $region58: #{tpu_custom_call.1} parent=1 // pred_check
      _
    $region59: #{tpu_custom_call.1} parent=1 // pred_check_branch
      %908 = sbr.rel (0) target = $region61
    $region60: #{tpu_custom_call.1} parent=1 // pred_region
      %909 = dma.done [#allocation4], 32
    $region61: #{tpu_custom_call.1} parent=1 // pred_fallthru
      _
    %910 = vsyncpa [#allocation3], 1
    %911 = vsyncpa [#allocation6], 1
    %912 = vsyncpa [#allocation9], 1
    %913 = vsyncpa [#allocation12], 1
    %914 = vsyncpa [#allocation4], 1

</llo_original>
